<compile_context>
chip_gen: v7x
topology: tpu7x:2x2x1
jax: 0.10.0
libtpu: 0.0.40
codegen_flags: <defaults>
</compile_context>

<pallas_src>
import jax
import jax.numpy as jnp
from jax.experimental import pallas as pl
from jax.experimental.pallas import tpu as pltpu

FEATURE_DIM = 32
HIDDEN1 = 512
HIDDEN2 = 256
NUM_DOMAINS = 4
OUT_PAD = 128          # lane-dense padded width for layer 3 / output
BATCH = 16
MAX_BLOCK_B = 256      # fills the 256-row MXU on v6e/v7x; 2x128 on v5e


def _leaky_relu(x, negative_slope=0.2):
    return jnp.where(x >= 0, x, negative_slope * x)


def server_discriminator_kernel(x_ref, w1_ref, w2_ref, w3_ref,
                                b1_ref, b2_ref, b3_ref, out_ref):
    x = x_ref[...].astype(jnp.bfloat16)                       # (TB, F)

    # Layer 1: Linear(F, 512) + LeakyReLU(0.2)  (bf16 MXU, f32 accumulate)
    h1 = jnp.dot(x, w1_ref[...],
                 preferred_element_type=jnp.float32) + b1_ref[...]
    h1 = _leaky_relu(h1)

    # Dropout(0.3) -> identity in eval mode.
    # TODO(synk): training-mode dropout (Bernoulli mask * 1/(1-p)) not implemented.

    # Layer 2: Linear(512, 256) + LeakyReLU(0.2)
    h2 = jnp.dot(h1.astype(jnp.bfloat16), w2_ref[...],
                 preferred_element_type=jnp.float32) + b2_ref[...]
    h2 = _leaky_relu(h2)

    # Layer 3: Linear(256, D) with D lane-padded to 128 (zero columns).
    logits = jnp.dot(h2.astype(jnp.bfloat16), w3_ref[...],
                     preferred_element_type=jnp.float32) + b3_ref[...]

    # Mask padded lanes so they never contribute to the softmax.
    lane = jax.lax.broadcasted_iota(jnp.int32, logits.shape, dimension=1)
    logits = jnp.where(lane < NUM_DOMAINS, logits, jnp.float32(-1e30))

    # LogSoftmax(dim=1), numerically stable (max shift + log-sum-exp), f32.
    m = jnp.max(logits, axis=1, keepdims=True)
    shifted = logits - m
    lse = jnp.log(jnp.sum(jnp.exp(shifted), axis=1, keepdims=True))
    out_ref[...] = shifted - lse                               # (TB, 128)


def server_discriminator(x, params, block_b=None):
    """x: (B, F) float32.  params: w1/w2 bf16, w3 bf16 lane-padded to 128 cols,
    b1/b2 f32, b3 f32 lane-padded to 128.  Returns (B, NUM_DOMAINS) f32."""
    B, F = x.shape
    assert F == FEATURE_DIM
    if block_b is None:
        # Whole batch in one step when it fits; otherwise 256-row tiles so
        # the grid stays >= 2 (and even) for v7x megacore sharding.
        block_b = B if B <= MAX_BLOCK_B else MAX_BLOCK_B
    assert B % block_b == 0, "batch must be a multiple of the batch tile"

    w1, w2, w3 = params["w1"], params["w2"], params["w3"]
    b1, b2, b3 = params["b1"], params["b2"], params["b3"]

    const = lambda shape: pl.BlockSpec(shape, lambda i: (0, 0))
    out_padded = pl.pallas_call(
        server_discriminator_kernel,
        out_shape=jax.ShapeDtypeStruct((B, OUT_PAD), jnp.float32),
        grid=(B // block_b,),
        in_specs=[
            pl.BlockSpec((block_b, FEATURE_DIM), lambda i: (i, 0)),  # x
            const(w1.shape),                                         # w1
            const(w2.shape),                                         # w2
            const(w3.shape),                                         # w3 (padded)
            const(b1.shape),                                         # b1
            const(b2.shape),                                         # b2
            const(b3.shape),                                         # b3 (padded)
        ],
        out_specs=pl.BlockSpec((block_b, OUT_PAD), lambda i: (i, 0)),
        compiler_params=pltpu.CompilerParams(
            dimension_semantics=("parallel",)),
    )(x, w1, w2, w3, b1, b2, b3)
    return out_padded[:, :NUM_DOMAINS]


def init_params(key, feature_dim, num_domains):
    """PyTorch nn.Linear default init: U(-1/sqrt(fan_in), 1/sqrt(fan_in)).

    Weights stored in bf16 (HBM-traffic halving).  Layer 3 weight/bias are
    zero-padded from num_domains to OUT_PAD=128 columns so every block and
    the output slab are lane-dense.
    """
    def linear(key, fan_in, fan_out):
        kw, kb = jax.random.split(key)
        bound = 1.0 / jnp.sqrt(jnp.float32(fan_in))
        w = jax.random.uniform(kw, (fan_in, fan_out), jnp.float32, -bound, bound)
        b = jax.random.uniform(kb, (1, fan_out), jnp.float32, -bound, bound)
        return w, b

    k1, k2, k3 = jax.random.split(key, 3)
    w1, b1 = linear(k1, feature_dim, HIDDEN1)
    w2, b2 = linear(k2, HIDDEN1, HIDDEN2)
    w3, b3 = linear(k3, HIDDEN2, num_domains)

    w3p = jnp.zeros((HIDDEN2, OUT_PAD), jnp.float32).at[:, :num_domains].set(w3)
    b3p = jnp.zeros((1, OUT_PAD), jnp.float32).at[:, :num_domains].set(b3)

    return dict(w1=w1.astype(jnp.bfloat16),
                w2=w2.astype(jnp.bfloat16),
                w3=w3p.astype(jnp.bfloat16),
                b1=b1, b2=b2, b3=b3p)


def reference(x, p):
    """Pure-JAX reference emulating the kernel's bf16-input / f32-accumulate dots."""
    def mm(a, w):
        return jnp.dot(a.astype(jnp.bfloat16).astype(jnp.float32),
                       w.astype(jnp.float32),
                       preferred_element_type=jnp.float32)

    h1 = _leaky_relu(mm(x, p["w1"]) + p["b1"])
    h2 = _leaky_relu(mm(h1, p["w2"]) + p["b2"])
    logits = mm(h2, p["w3"][:, :NUM_DOMAINS]) + p["b3"][:, :NUM_DOMAINS]
    return jax.nn.log_softmax(logits, axis=1)


if __name__ == "__main__":
    key = jax.random.PRNGKey(0)
    kx, kp = jax.random.split(key)
    x = jax.random.normal(kx, (BATCH, FEATURE_DIM), jnp.float32)
    params = init_params(kp, FEATURE_DIM, NUM_DOMAINS)

    out = server_discriminator(x, params)
    out = jax.block_until_ready(out)

    ref = reference(x, params)
    assert out.shape == (BATCH, NUM_DOMAINS)
    assert jnp.allclose(out, ref, atol=1e-3, rtol=1e-3), (
        f"max abs err {jnp.max(jnp.abs(out - ref))}")
    print("KERNEL_OK")
</pallas_src>

<mosaic_0001>
module attributes {stable_mosaic.version = 11 : i64} {
  func.func @server_discriminator_kernel(%arg0: i32, %arg1: memref<16x32xf32, #tpu.memory_space<vmem>>, %arg2: memref<32x512xbf16, #tpu.memory_space<vmem>>, %arg3: memref<512x256xbf16, #tpu.memory_space<vmem>>, %arg4: memref<256x128xbf16, #tpu.memory_space<vmem>>, %arg5: memref<1x512xf32, #tpu.memory_space<vmem>>, %arg6: memref<1x256xf32, #tpu.memory_space<vmem>>, %arg7: memref<1x128xf32, #tpu.memory_space<vmem>>, %arg8: memref<16x128xf32, #tpu.memory_space<vmem>>) attributes {dimension_semantics = [#tpu.dimension_semantics<parallel>], iteration_bounds = array<i64: 1>, scalar_prefetch = 0 : i64, scratch_operands = 0 : i64, tpu.core_type = #tpu.core_type<tc>, window_params = [{transform_indices = @transform_0, window_bounds = array<i64: 16, 32>}, {pipeline_mode = #tpu.pipeline_mode<synchronous>, transform_indices = @transform_1, window_bounds = array<i64: 32, 512>}, {pipeline_mode = #tpu.pipeline_mode<synchronous>, transform_indices = @transform_2, window_bounds = array<i64: 512, 256>}, {pipeline_mode = #tpu.pipeline_mode<synchronous>, transform_indices = @transform_3, window_bounds = array<i64: 256, 128>}, {pipeline_mode = #tpu.pipeline_mode<synchronous>, transform_indices = @transform_4, window_bounds = array<i64: 1, 512>}, {pipeline_mode = #tpu.pipeline_mode<synchronous>, transform_indices = @transform_5, window_bounds = array<i64: 1, 256>}, {pipeline_mode = #tpu.pipeline_mode<synchronous>, transform_indices = @transform_6, window_bounds = array<i64: 1, 128>}, {transform_indices = @transform_7, window_bounds = array<i64: 16, 128>}]} {
    %c0 = arith.constant 0 : index
    %c0_0 = arith.constant 0 : index
    %0 = vector.load %arg1[%c0, %c0_0] : memref<16x32xf32, #tpu.memory_space<vmem>>, vector<16x32xf32>
    %1 = arith.truncf %0 : vector<16x32xf32> to vector<16x32xbf16>
    %c0_1 = arith.constant 0 : index
    %c0_2 = arith.constant 0 : index
    %2 = vector.load %arg2[%c0_1, %c0_2] : memref<32x512xbf16, #tpu.memory_space<vmem>>, vector<32x512xbf16>
    %cst = arith.constant dense<0.000000e+00> : vector<16x512xf32>
    %3 = tpu.matmul %1, %2, %cst {dimension_numbers = #tpu.dot_dimension_numbers<[1], [0], [0], [1], [0, 0, 1, 1], [], []>} : vector<16x32xbf16>, vector<32x512xbf16>, vector<16x512xf32> -> vector<16x512xf32>
    %c0_3 = arith.constant 0 : index
    %c0_4 = arith.constant 0 : index
    %4 = vector.load %arg5[%c0_3, %c0_4] : memref<1x512xf32, #tpu.memory_space<vmem>>, vector<1x512xf32>
    %5 = vector.broadcast %4 : vector<1x512xf32> to vector<16x512xf32>
    %6 = arith.addf %3, %5 : vector<16x512xf32>
    %cst_5 = arith.constant 0.000000e+00 : f32
    %7 = vector.broadcast %cst_5 : f32 to vector<16x512xf32>
    %8 = arith.cmpf oge, %6, %7 : vector<16x512xf32>
    %cst_6 = arith.constant 2.000000e-01 : f32
    %9 = vector.broadcast %cst_6 : f32 to vector<16x512xf32>
    %10 = arith.mulf %9, %6 : vector<16x512xf32>
    %11 = arith.select %8, %6, %10 : vector<16x512xi1>, vector<16x512xf32>
    %12 = arith.truncf %11 : vector<16x512xf32> to vector<16x512xbf16>
    %c0_7 = arith.constant 0 : index
    %c0_8 = arith.constant 0 : index
    %13 = vector.load %arg3[%c0_7, %c0_8] : memref<512x256xbf16, #tpu.memory_space<vmem>>, vector<512x256xbf16>
    %cst_9 = arith.constant dense<0.000000e+00> : vector<16x256xf32>
    %14 = tpu.matmul %12, %13, %cst_9 {dimension_numbers = #tpu.dot_dimension_numbers<[1], [0], [0], [1], [0, 0, 1, 1], [], []>} : vector<16x512xbf16>, vector<512x256xbf16>, vector<16x256xf32> -> vector<16x256xf32>
    %c0_10 = arith.constant 0 : index
    %c0_11 = arith.constant 0 : index
    %15 = vector.load %arg6[%c0_10, %c0_11] : memref<1x256xf32, #tpu.memory_space<vmem>>, vector<1x256xf32>
    %16 = vector.broadcast %15 : vector<1x256xf32> to vector<16x256xf32>
    %17 = arith.addf %14, %16 : vector<16x256xf32>
    %cst_12 = arith.constant 0.000000e+00 : f32
    %18 = vector.broadcast %cst_12 : f32 to vector<16x256xf32>
    %19 = arith.cmpf oge, %17, %18 : vector<16x256xf32>
    %cst_13 = arith.constant 2.000000e-01 : f32
    %20 = vector.broadcast %cst_13 : f32 to vector<16x256xf32>
    %21 = arith.mulf %20, %17 : vector<16x256xf32>
    %22 = arith.select %19, %17, %21 : vector<16x256xi1>, vector<16x256xf32>
    %23 = arith.truncf %22 : vector<16x256xf32> to vector<16x256xbf16>
    %c0_14 = arith.constant 0 : index
    %c0_15 = arith.constant 0 : index
    %24 = vector.load %arg4[%c0_14, %c0_15] : memref<256x128xbf16, #tpu.memory_space<vmem>>, vector<256x128xbf16>
    %cst_16 = arith.constant dense<0.000000e+00> : vector<16x128xf32>
    %25 = tpu.matmul %23, %24, %cst_16 {dimension_numbers = #tpu.dot_dimension_numbers<[1], [0], [0], [1], [0, 0, 1, 1], [], []>} : vector<16x256xbf16>, vector<256x128xbf16>, vector<16x128xf32> -> vector<16x128xf32>
    %c0_17 = arith.constant 0 : index
    %c0_18 = arith.constant 0 : index
    %26 = vector.load %arg7[%c0_17, %c0_18] : memref<1x128xf32, #tpu.memory_space<vmem>>, vector<1x128xf32>
    %27 = vector.broadcast %26 : vector<1x128xf32> to vector<16x128xf32>
    %28 = arith.addf %25, %27 : vector<16x128xf32>
    %29 = tpu.iota {dimensions = array<i32: 1>} : vector<16x128xi32>
    %c4_i32 = arith.constant 4 : i32
    %30 = vector.broadcast %c4_i32 : i32 to vector<16x128xi32>
    %31 = arith.cmpi slt, %29, %30 : vector<16x128xi32>
    %cst_19 = arith.constant -1.000000e+30 : f32
    %32 = vector.broadcast %cst_19 : f32 to vector<16x128xf32>
    %33 = arith.select %31, %28, %32 : vector<16x128xi1>, vector<16x128xf32>
    %cst_20 = arith.constant dense<0xFF800000> : vector<16xf32>
    %34 = vector.multi_reduction <maximumf>, %33, %cst_20 [1] : vector<16x128xf32> to vector<16xf32>
    %35 = vector.shape_cast %34 : vector<16xf32> to vector<16x1xf32>
    %36 = vector.broadcast %35 : vector<16x1xf32> to vector<16x128xf32>
    %37 = arith.subf %33, %36 : vector<16x128xf32>
    %38 = math.exp %37 : vector<16x128xf32>
    %cst_21 = arith.constant dense<0.000000e+00> : vector<16xf32>
    %39 = vector.multi_reduction <add>, %38, %cst_21 [1] : vector<16x128xf32> to vector<16xf32>
    %40 = vector.shape_cast %39 : vector<16xf32> to vector<16x1xf32>
    %41 = math.log %40 : vector<16x1xf32>
    %42 = vector.broadcast %41 : vector<16x1xf32> to vector<16x128xf32>
    %43 = arith.subf %37, %42 : vector<16x128xf32>
    %c0_22 = arith.constant 0 : index
    %c0_23 = arith.constant 0 : index
    %44 = vector.load %arg8[%c0_22, %c0_23] : memref<16x128xf32, #tpu.memory_space<vmem>>, vector<16x128xf32>
    tpu.vector_store %arg8[%c0_22, %c0_23], %43 {strides = array<i32>} : memref<16x128xf32, #tpu.memory_space<vmem>>, vector<16x128xf32>,
    return
  }
  func.func @transform_0(%arg0: i32) -> (i32, i32) {
    %c0_i32 = arith.constant 0 : i32
    %c0_i32_0 = arith.constant 0 : i32
    return %arg0, %c0_i32 : i32, i32
  }
  func.func @transform_1(%arg0: i32) -> (i32, i32) {
    %c0_i32 = arith.constant 0 : i32
    %c0_i32_0 = arith.constant 0 : i32
    %c0_i32_1 = arith.constant 0 : i32
    return %c0_i32, %c0_i32_0 : i32, i32
  }
  func.func @transform_2(%arg0: i32) -> (i32, i32) {
    %c0_i32 = arith.constant 0 : i32
    %c0_i32_0 = arith.constant 0 : i32
    %c0_i32_1 = arith.constant 0 : i32
    return %c0_i32, %c0_i32_0 : i32, i32
  }
  func.func @transform_3(%arg0: i32) -> (i32, i32) {
    %c0_i32 = arith.constant 0 : i32
    %c0_i32_0 = arith.constant 0 : i32
    %c0_i32_1 = arith.constant 0 : i32
    return %c0_i32, %c0_i32_0 : i32, i32
  }
  func.func @transform_4(%arg0: i32) -> (i32, i32) {
    %c0_i32 = arith.constant 0 : i32
    %c0_i32_0 = arith.constant 0 : i32
    %c0_i32_1 = arith.constant 0 : i32
    return %c0_i32, %c0_i32_0 : i32, i32
  }
  func.func @transform_5(%arg0: i32) -> (i32, i32) {
    %c0_i32 = arith.constant 0 : i32
    %c0_i32_0 = arith.constant 0 : i32
    %c0_i32_1 = arith.constant 0 : i32
    return %c0_i32, %c0_i32_0 : i32, i32
  }
  func.func @transform_6(%arg0: i32) -> (i32, i32) {
    %c0_i32 = arith.constant 0 : i32
    %c0_i32_0 = arith.constant 0 : i32
    %c0_i32_1 = arith.constant 0 : i32
    return %c0_i32, %c0_i32_0 : i32, i32
  }
  func.func @transform_7(%arg0: i32) -> (i32, i32) {
    %c0_i32 = arith.constant 0 : i32
    %c0_i32_0 = arith.constant 0 : i32
    return %arg0, %c0_i32 : i32, i32
  }
}

</mosaic_0001>

<llo_original>
// kernel: tpu_custom_call.1
$region0: #{tpu_custom_call.1}
  #allocation0 [shape = 'u32[]', space=smem, size = 0x4, offset = 0x4, fixed_abs, tag = 'smem constant byte address 0x4 - core index']
  #allocation1 [shape = 'u32[144,128]{1,0:T(1,128)}', space=vmem, size = 0x12000, scoped, tag = 'internal scratch']
  %s0 = inlined_call_operand.hbm [shape: f32[16,32], index: 0, kind: input, shape index: {}]
  %s1 = inlined_call_operand.hbm [shape: bf16[32,512], index: 1, kind: input, shape index: {}]
  %s2 = inlined_call_operand.hbm [shape: bf16[512,256], index: 2, kind: input, shape index: {}]
  %s3 = inlined_call_operand.hbm [shape: bf16[256,128], index: 3, kind: input, shape index: {}]
  %s4 = inlined_call_operand.vmem [shape: f32[1,512], index: 4, kind: input, shape index: {}]
  %s5 = inlined_call_operand.vmem [shape: f32[1,256], index: 5, kind: input, shape index: {}]
  %s6 = inlined_call_operand.vmem [shape: f32[1,128], index: 6, kind: input, shape index: {}]
  %s7 = inlined_call_operand.hbm [shape: f32[16,128], index: 7, kind: output, shape index: {}]
  %s8 = sld [smem:[#allocation0]]
  $region54: #{tpu_custom_call.1} parent=0
    _
  %s10 = ssub.s32 1, %s8
  %s11 = scalar_select 0, %s10, %s8
  $region1: #{tpu_custom_call.1} parent=0
    #allocation2 [shape = 'u8[8192]{0}', space=vmem, size = 0x2000, scoped, tag = 'input window, operand 0, single buffered']
    #allocation3 [shape = 's32[1]{0}', space=sflag, size = 0x4, scoped, tag = 'scoped memory for tpu_custom_call.1']
    #allocation4 [shape = 's32[1]{0}', space=sflag, size = 0x4, scoped, tag = 'scoped memory for tpu_custom_call.1']
    #allocation5 [shape = 'u8[32768]{0}', space=vmem, size = 0x8000, scoped, tag = 'input window, operand 1, single buffered']
    #allocation6 [shape = 's32[1]{0}', space=sflag, size = 0x4, scoped, tag = 'scoped memory for tpu_custom_call.1']
    #allocation7 [shape = 'u8[262144]{0}', space=vmem, size = 0x40000, scoped, tag = 'input window, operand 2, single buffered']
    #allocation8 [shape = 'u8[65536]{0}', space=vmem, size = 0x10000, scoped, tag = 'input window, operand 3, single buffered']
    #allocation9 [shape = 's32[1]{0}', space=sflag, size = 0x4, scoped, tag = 'scoped memory for tpu_custom_call.1']
    #allocation10 [shape = 'u8[8192]{0}', space=vmem, size = 0x2000, scoped, tag = 'output window, operand 0, single buffered']
    %12 = vsyncpa [#allocation3], 0
    %13 = vsyncpa [#allocation6], 0
    %14 = vsyncpa [#allocation9], 0
    %15 = vsyncpa [#allocation4], 0
    // Predicated region
    $region2: #{tpu_custom_call.1} parent=1 // pred_check
      _
    $region3: #{tpu_custom_call.1} parent=1 // pred_check_branch
      %17 = sbr.rel (0) target = $region5
    $region4: #{tpu_custom_call.1} parent=1 // pred_region
      %s19 = ssub.s32 256, 256
      %20 = vsyncadd [#allocation3], %s19
      %s21 = sshll.u32 [#allocation2], 4
      %s22 = int_to_ptr.vmem [resolvable:$true] %s21
      %27 = dma.hbm_to_vmem [thread:$0]  %s0, 256, %s22, [#allocation3], 128, 128, 8
    $region5: #{tpu_custom_call.1} parent=1 // pred_fallthru
      _
    // Predicated region
    $region6: #{tpu_custom_call.1} parent=1 // pred_check
      _
    $region7: #{tpu_custom_call.1} parent=1 // pred_check_branch
      %29 = sbr.rel (0) target = $region9
    $region8: #{tpu_custom_call.1} parent=1 // pred_region
      %s31 = ssub.s32 1024, 1024
      %32 = vsyncadd [#allocation6], %s31
      %s33 = sshll.u32 [#allocation5], 4
      %s34 = int_to_ptr.vmem [resolvable:$true] %s33
      %39 = dma.hbm_to_vmem [thread:$0]  %s1, 1024, %s34, [#allocation6], 256, 256, 16
    $region9: #{tpu_custom_call.1} parent=1 // pred_fallthru
      _
    // Predicated region
    $region10: #{tpu_custom_call.1} parent=1 // pred_check
      _
    $region11: #{tpu_custom_call.1} parent=1 // pred_check_branch
      %41 = sbr.rel (0) target = $region13
    $region12: #{tpu_custom_call.1} parent=1 // pred_region
      %s43 = ssub.s32 8192, 8192
      %44 = vsyncadd [#allocation6], %s43
      %s45 = sshll.u32 [#allocation7], 4
      %s46 = int_to_ptr.vmem [resolvable:$true] %s45
      %51 = dma.hbm_to_vmem [thread:$0]  %s2, 8192, %s46, [#allocation6], 128, 128, 8
    $region13: #{tpu_custom_call.1} parent=1 // pred_fallthru
      _
    // Predicated region
    $region14: #{tpu_custom_call.1} parent=1 // pred_check
      _
    $region15: #{tpu_custom_call.1} parent=1 // pred_check_branch
      %53 = sbr.rel (0) target = $region17
    $region16: #{tpu_custom_call.1} parent=1 // pred_region
      %s55 = ssub.s32 2048, 2048
      %56 = vsyncadd [#allocation9], %s55
      %s57 = sshll.u32 [#allocation8], 4
      %s58 = int_to_ptr.vmem [resolvable:$true] %s57
      %63 = dma.hbm_to_vmem [thread:$0]  %s3, 2048, %s58, [#allocation9], 64, 64, 4
    $region17: #{tpu_custom_call.1} parent=1 // pred_fallthru
      _
    // Predicated region
    $region18: #{tpu_custom_call.1} parent=1 // pred_check
      _
    $region19: #{tpu_custom_call.1} parent=1 // pred_check_branch
      %65 = sbr.rel (0) target = $region21
    $region20: #{tpu_custom_call.1} parent=1 // pred_region
      _
    $region21: #{tpu_custom_call.1} parent=1 // pred_fallthru
      _
    // Predicated region
    $region22: #{tpu_custom_call.1} parent=1 // pred_check
      _
    $region23: #{tpu_custom_call.1} parent=1 // pred_check_branch
      %67 = sbr.rel (0) target = $region25
    $region24: #{tpu_custom_call.1} parent=1 // pred_region
      _
    $region25: #{tpu_custom_call.1} parent=1 // pred_fallthru
      _
    // Predicated region
    $region26: #{tpu_custom_call.1} parent=1 // pred_check
      _
    $region27: #{tpu_custom_call.1} parent=1 // pred_check_branch
      %69 = sbr.rel (0) target = $region29
    $region28: #{tpu_custom_call.1} parent=1 // pred_region
      _
    $region29: #{tpu_custom_call.1} parent=1 // pred_fallthru
      _
    // Predicated region
    $region30: #{tpu_custom_call.1} parent=1 // pred_check
      _
    $region31: #{tpu_custom_call.1} parent=1 // pred_check_branch
      %71 = sbr.rel (0) target = $region33
    $region32: #{tpu_custom_call.1} parent=1 // pred_region
      %72 = dma.done [#allocation3], 256
    $region33: #{tpu_custom_call.1} parent=1 // pred_fallthru
      _
    // Predicated region
    $region34: #{tpu_custom_call.1} parent=1 // pred_check
      _
    $region35: #{tpu_custom_call.1} parent=1 // pred_check_branch
      %74 = sbr.rel (0) target = $region37
    $region36: #{tpu_custom_call.1} parent=1 // pred_region
      %75 = dma.done [#allocation6], 1024
    $region37: #{tpu_custom_call.1} parent=1 // pred_fallthru
      _
    // Predicated region
    $region38: #{tpu_custom_call.1} parent=1 // pred_check
      _
    $region39: #{tpu_custom_call.1} parent=1 // pred_check_branch
      %77 = sbr.rel (0) target = $region41
    $region40: #{tpu_custom_call.1} parent=1 // pred_region
      %78 = dma.done [#allocation6], 8192
    $region41: #{tpu_custom_call.1} parent=1 // pred_fallthru
      _
    // Predicated region
    $region42: #{tpu_custom_call.1} parent=1 // pred_check
      _
    $region43: #{tpu_custom_call.1} parent=1 // pred_check_branch
      %80 = sbr.rel (0) target = $region45
    $region44: #{tpu_custom_call.1} parent=1 // pred_region
      %81 = dma.done [#allocation9], 2048
    $region45: #{tpu_custom_call.1} parent=1 // pred_fallthru
      _
    %v83 = vld [vmem:[#allocation2] sm:$0xff]
    %v84 = vld [vmem:[#allocation2 + $0x8] sm:$0xff]
    %v85 = vpack.c.bf16 %v84, %v83
    %v86 = vld [vmem:[#allocation5] sm:$0xff]
    %v87 = vld [vmem:[#allocation5 + $0x8] sm:$0xff]
    %v88 = vld [vmem:[#allocation5 + $0x10] sm:$0xff]
    %v89 = vld [vmem:[#allocation5 + $0x18] sm:$0xff]
    %v90 = vld [vmem:[#allocation5 + $0x20] sm:$0xff]
    %v91 = vld [vmem:[#allocation5 + $0x28] sm:$0xff]
    %v92 = vld [vmem:[#allocation5 + $0x30] sm:$0xff]
    %v93 = vld [vmem:[#allocation5 + $0x38] sm:$0xff]
    %v94 = vld [vmem:[%s4] sm:$0xf]
    %v96 = vlaneseq
    %v97 = vshrl.u32 %v96, 7
    %v98 = vsub.s32 0, %v97
    %v99 = vrot.slane %v94, %v98
    %v100 = vlaneseq
    %v101 = vshrl.u32 %v100, 7
    %v102 = vsub.s32 1, %v101
    %v103 = vrot.slane %v94, %v102
    %v104 = vlaneseq
    %v105 = vshrl.u32 %v104, 7
    %v106 = vsub.s32 2, %v105
    %v107 = vrot.slane %v94, %v106
    %v108 = vlaneseq
    %v109 = vshrl.u32 %v108, 7
    %v110 = vsub.s32 3, %v109
    %v111 = vrot.slane %v94, %v110
    %v124 = vunpack.c.l.b16 %v86
    %v125 = vunpack.c.h.b16 %v86
    %v126 = vunpack.c.l.b16 %v87
    %v127 = vunpack.c.h.b16 %v87
    %v128 = vunpack.c.l.b16 %v88
    %v129 = vunpack.c.h.b16 %v88
    %v130 = vunpack.c.l.b16 %v89
    %v131 = vunpack.c.h.b16 %v89
    %v132 = vunpack.c.l.b16 %v90
    %v133 = vunpack.c.h.b16 %v90
    %v134 = vunpack.c.l.b16 %v91
    %v135 = vunpack.c.h.b16 %v91
    %v136 = vunpack.c.l.b16 %v92
    %v137 = vunpack.c.h.b16 %v92
    %v138 = vunpack.c.l.b16 %v93
    %v139 = vunpack.c.h.b16 %v93
    %v140 = vpack.c.b16 %v128, %v124
    %v141 = vpack.c.b16 %v129, %v125
    %v142 = vpack.c.b16 %v130, %v126
    %v143 = vpack.c.b16 %v131, %v127
    %v144 = vpack.c.b16 %v136, %v132
    %v145 = vpack.c.b16 %v137, %v133
    %v146 = vpack.c.b16 %v138, %v134
    %v147 = vpack.c.b16 %v139, %v135
    %vm156 = vcmask 261120
    %v158 = vsel %vm156, %v85, 0
    %160 = vmatprep.subr.bf16.mxu0 %v141
    %161 = vmatpush1.bf16.msra.mxu0 %v140
    %162 = vmatprep.subr.bf16.mxu0 %v145
    %163 = vmatpush1.bf16.msra.mxu0 %v144
    %164 = vmatprep.subr.bf16.mxu0 0
    %165 = vmatpush1.bf16.msra.mxu0 0
    %166 = vmatprep.subr.bf16.mxu0 0
    %167 = vmatpush1.bf16.msra.mxu0 0
    %168 = vmatprep.subr.bf16.mxu0 0
    %169 = vmatpush1.bf16.msra.mxu0 0
    %170 = vmatprep.subr.bf16.mxu0 0
    %171 = vmatpush1.bf16.msra.mxu0 0
    %172 = vmatprep.subr.bf16.mxu0 0
    %173 = vmatpush1.bf16.msra.mxu0 0
    %174 = vmatprep.subr.bf16.mxu0 0
    %175 = vmatpush1.bf16.msra.mxu0 0
    %176 = vmatprep.subr.bf16.mxu0 0
    %177 = vmatpush1.bf16.msra.mxu0 0
    %178 = vmatprep.subr.bf16.mxu0 0
    %179 = vmatpush1.bf16.msra.mxu0 0
    %180 = vmatprep.subr.bf16.mxu0 0
    %181 = vmatpush1.bf16.msra.mxu0 0
    %182 = vmatprep.subr.bf16.mxu0 0
    %183 = vmatpush1.bf16.msra.mxu0 0
    %184 = vmatprep.subr.bf16.mxu0 0
    %185 = vmatpush1.bf16.msra.mxu0 0
    %186 = vmatprep.subr.bf16.mxu0 0
    %187 = vmatpush1.bf16.msra.mxu0 0
    %188 = vmatprep.subr.bf16.mxu0 0
    %189 = vmatpush1.bf16.msra.mxu0 0
    %190 = vmatprep.subr.bf16.mxu0 0
    %191 = vmatpush1.bf16.msra.mxu0 0
    %192 = vmatprep.mubr.bf16.mxu0 0
    %193 = vmatmul.mubr.bf16.gmra.mrb[0].mxu0 %v158
    %v194 = vpop.f32.mrb[0].mxu0
    %v195 = vadd.f32 %v99, %v194
    %v196 = vpop.f32.mrb[0].mxu0
    %v197 = vadd.f32 %v103, %v196
    %v198 = vpop.f32.mrb[0].mxu0
    %v199 = vadd.f32 %v99, %v198
    %v200 = vpop.f32.mrb[0].mxu0
    %v201 = vadd.f32 %v103, %v200
    %202 = vdwg.mxu0
    %203 = vmatprep.subr.bf16.mxu0 %v143
    %204 = vmatpush1.bf16.msra.mxu0 %v142
    %205 = vmatprep.subr.bf16.mxu0 %v147
    %206 = vmatpush1.bf16.msra.mxu0 %v146
    %207 = vmatprep.subr.bf16.mxu0 0
    %208 = vmatpush1.bf16.msra.mxu0 0
    %209 = vmatprep.subr.bf16.mxu0 0
    %210 = vmatpush1.bf16.msra.mxu0 0
    %211 = vmatprep.subr.bf16.mxu0 0
    %212 = vmatpush1.bf16.msra.mxu0 0
    %213 = vmatprep.subr.bf16.mxu0 0
    %214 = vmatpush1.bf16.msra.mxu0 0
    %215 = vmatprep.subr.bf16.mxu0 0
    %216 = vmatpush1.bf16.msra.mxu0 0
    %217 = vmatprep.subr.bf16.mxu0 0
    %218 = vmatpush1.bf16.msra.mxu0 0
    %219 = vmatprep.subr.bf16.mxu0 0
    %220 = vmatpush1.bf16.msra.mxu0 0
    %221 = vmatprep.subr.bf16.mxu0 0
    %222 = vmatpush1.bf16.msra.mxu0 0
    %223 = vmatprep.subr.bf16.mxu0 0
    %224 = vmatpush1.bf16.msra.mxu0 0
    %225 = vmatprep.subr.bf16.mxu0 0
    %226 = vmatpush1.bf16.msra.mxu0 0
    %227 = vmatprep.subr.bf16.mxu0 0
    %228 = vmatpush1.bf16.msra.mxu0 0
    %229 = vmatprep.subr.bf16.mxu0 0
    %230 = vmatpush1.bf16.msra.mxu0 0
    %231 = vmatprep.subr.bf16.mxu0 0
    %232 = vmatpush1.bf16.msra.mxu0 0
    %233 = vmatprep.subr.bf16.mxu0 0
    %234 = vmatpush1.bf16.msra.mxu0 0
    %235 = vmatprep.mubr.bf16.mxu0 0
    %236 = vmatmul.mubr.bf16.gmra.mrb[0].mxu0 %v158
    %v237 = vpop.f32.mrb[0].mxu0
    %v238 = vadd.f32 %v107, %v237
    %v239 = vpop.f32.mrb[0].mxu0
    %v240 = vadd.f32 %v111, %v239
    %v241 = vpop.f32.mrb[0].mxu0
    %v242 = vadd.f32 %v107, %v241
    %v243 = vpop.f32.mrb[0].mxu0
    %v244 = vadd.f32 %v111, %v243
    %245 = vdwg.mxu0
    %vm246 = vcmp.ge.f32.partialorder %v195, 0.0
    %vm247 = vcmp.ge.f32.partialorder %v197, 0.0
    %vm248 = vcmp.ge.f32.partialorder %v238, 0.0
    %vm249 = vcmp.ge.f32.partialorder %v240, 0.0
    %vm250 = vcmp.ge.f32.partialorder %v199, 0.0
    %vm251 = vcmp.ge.f32.partialorder %v201, 0.0
    %vm252 = vcmp.ge.f32.partialorder %v242, 0.0
    %vm253 = vcmp.ge.f32.partialorder %v244, 0.0
    %v254 = vmul.f32 %v195, 0.2
    %v255 = vmul.f32 %v197, 0.2
    %v256 = vmul.f32 %v238, 0.2
    %v257 = vmul.f32 %v240, 0.2
    %v258 = vmul.f32 %v199, 0.2
    %v259 = vmul.f32 %v201, 0.2
    %v260 = vmul.f32 %v242, 0.2
    %v261 = vmul.f32 %v244, 0.2
    %v262 = vsel %vm246, %v195, %v254
    %v263 = vsel %vm247, %v197, %v255
    %v264 = vsel %vm248, %v238, %v256
    %v265 = vsel %vm249, %v240, %v257
    %v266 = vsel %vm250, %v199, %v258
    %v267 = vsel %vm251, %v201, %v259
    %v268 = vsel %vm252, %v242, %v260
    %v269 = vsel %vm253, %v244, %v261
    %v270 = vpack.c.bf16 %v266, %v262
    %v271 = vpack.c.bf16 %v267, %v263
    %v272 = vpack.c.bf16 %v268, %v264
    %v273 = vpack.c.bf16 %v269, %v265
    %v274 = vld [vmem:[#allocation7] sm:$0xff]
    %v275 = vld [vmem:[#allocation7 + $0x8] sm:$0xff]
    %v276 = vld [vmem:[#allocation7 + $0x10] sm:$0xff]
    %v277 = vld [vmem:[#allocation7 + $0x18] sm:$0xff]
    %v278 = vld [vmem:[#allocation7 + $0x20] sm:$0xff]
    %v279 = vld [vmem:[#allocation7 + $0x28] sm:$0xff]
    %v280 = vld [vmem:[#allocation7 + $0x30] sm:$0xff]
    %v281 = vld [vmem:[#allocation7 + $0x38] sm:$0xff]
    %v282 = vld [vmem:[#allocation7 + $0x40] sm:$0xff]
    %v283 = vld [vmem:[#allocation7 + $0x48] sm:$0xff]
    %v284 = vld [vmem:[#allocation7 + $0x50] sm:$0xff]
    %v285 = vld [vmem:[#allocation7 + $0x58] sm:$0xff]
    %v286 = vld [vmem:[#allocation7 + $0x60] sm:$0xff]
    %v287 = vld [vmem:[#allocation7 + $0x68] sm:$0xff]
    %v288 = vld [vmem:[#allocation7 + $0x70] sm:$0xff]
    %v289 = vld [vmem:[#allocation7 + $0x78] sm:$0xff]
    %v290 = vld [vmem:[#allocation7 + $0x80] sm:$0xff]
    %v291 = vld [vmem:[#allocation7 + $0x88] sm:$0xff]
    %v292 = vld [vmem:[#allocation7 + $0x90] sm:$0xff]
    %v293 = vld [vmem:[#allocation7 + $0x98] sm:$0xff]
    %v294 = vld [vmem:[#allocation7 + $0xa0] sm:$0xff]
    %v295 = vld [vmem:[#allocation7 + $0xa8] sm:$0xff]
    %v296 = vld [vmem:[#allocation7 + $0xb0] sm:$0xff]
    %v297 = vld [vmem:[#allocation7 + $0xb8] sm:$0xff]
    %v298 = vld [vmem:[#allocation7 + $0xc0] sm:$0xff]
    %v299 = vld [vmem:[#allocation7 + $0xc8] sm:$0xff]
    %v300 = vld [vmem:[#allocation7 + $0xd0] sm:$0xff]
    %v301 = vld [vmem:[#allocation7 + $0xd8] sm:$0xff]
    %v302 = vld [vmem:[#allocation7 + $0xe0] sm:$0xff]
    %v303 = vld [vmem:[#allocation7 + $0xe8] sm:$0xff]
    %v304 = vld [vmem:[#allocation7 + $0xf0] sm:$0xff]
    %v305 = vld [vmem:[#allocation7 + $0xf8] sm:$0xff]
    %v306 = vld [vmem:[#allocation7 + $0x100] sm:$0xff]
    %v307 = vld [vmem:[#allocation7 + $0x108] sm:$0xff]
    %v308 = vld [vmem:[#allocation7 + $0x110] sm:$0xff]
    %v309 = vld [vmem:[#allocation7 + $0x118] sm:$0xff]
    %v310 = vld [vmem:[#allocation7 + $0x120] sm:$0xff]
    %v311 = vld [vmem:[#allocation7 + $0x128] sm:$0xff]
    %v312 = vld [vmem:[#allocation7 + $0x130] sm:$0xff]
    %v313 = vld [vmem:[#allocation7 + $0x138] sm:$0xff]
    %v314 = vld [vmem:[#allocation7 + $0x140] sm:$0xff]
    %v315 = vld [vmem:[#allocation7 + $0x148] sm:$0xff]
    %v316 = vld [vmem:[#allocation7 + $0x150] sm:$0xff]
    %v317 = vld [vmem:[#allocation7 + $0x158] sm:$0xff]
    %v318 = vld [vmem:[#allocation7 + $0x160] sm:$0xff]
    %v319 = vld [vmem:[#allocation7 + $0x168] sm:$0xff]
    %v320 = vld [vmem:[#allocation7 + $0x170] sm:$0xff]
    %v321 = vld [vmem:[#allocation7 + $0x178] sm:$0xff]
    %v322 = vld [vmem:[#allocation7 + $0x180] sm:$0xff]
    %v323 = vld [vmem:[#allocation7 + $0x188] sm:$0xff]
    %v324 = vld [vmem:[#allocation7 + $0x190] sm:$0xff]
    %v325 = vld [vmem:[#allocation7 + $0x198] sm:$0xff]
    %v326 = vld [vmem:[#allocation7 + $0x1a0] sm:$0xff]
    %v327 = vld [vmem:[#allocation7 + $0x1a8] sm:$0xff]
    %v328 = vld [vmem:[#allocation7 + $0x1b0] sm:$0xff]
    %v329 = vld [vmem:[#allocation7 + $0x1b8] sm:$0xff]
    %v330 = vld [vmem:[#allocation7 + $0x1c0] sm:$0xff]
    %v331 = vld [vmem:[#allocation7 + $0x1c8] sm:$0xff]
    %v332 = vld [vmem:[#allocation7 + $0x1d0] sm:$0xff]
    %v333 = vld [vmem:[#allocation7 + $0x1d8] sm:$0xff]
    %v334 = vld [vmem:[#allocation7 + $0x1e0] sm:$0xff]
    %v335 = vld [vmem:[#allocation7 + $0x1e8] sm:$0xff]
    %v336 = vld [vmem:[#allocation7 + $0x1f0] sm:$0xff]
    %v337 = vld [vmem:[#allocation7 + $0x1f8] sm:$0xff]
    %v338 = vld [vmem:[%s5] sm:$0x3]
    %v340 = vlaneseq
    %v341 = vshrl.u32 %v340, 7
    %v342 = vsub.s32 0, %v341
    %v343 = vrot.slane %v338, %v342
    %v344 = vlaneseq
    %v345 = vshrl.u32 %v344, 7
    %v346 = vsub.s32 1, %v345
    %v347 = vrot.slane %v338, %v346
    %v414 = vunpack.c.l.b16 %v274
    %v415 = vunpack.c.h.b16 %v274
    %v416 = vunpack.c.l.b16 %v275
    %v417 = vunpack.c.h.b16 %v275
    %v418 = vunpack.c.l.b16 %v276
    %v419 = vunpack.c.h.b16 %v276
    %v420 = vunpack.c.l.b16 %v277
    %v421 = vunpack.c.h.b16 %v277
    %v422 = vunpack.c.l.b16 %v278
    %v423 = vunpack.c.h.b16 %v278
    %v424 = vunpack.c.l.b16 %v279
    %v425 = vunpack.c.h.b16 %v279
    %v426 = vunpack.c.l.b16 %v280
    %v427 = vunpack.c.h.b16 %v280
    %v428 = vunpack.c.l.b16 %v281
    %v429 = vunpack.c.h.b16 %v281
    %v430 = vunpack.c.l.b16 %v282
    %v431 = vunpack.c.h.b16 %v282
    %v432 = vunpack.c.l.b16 %v283
    %v433 = vunpack.c.h.b16 %v283
    %v434 = vunpack.c.l.b16 %v284
    %v435 = vunpack.c.h.b16 %v284
    %v436 = vunpack.c.l.b16 %v285
    %v437 = vunpack.c.h.b16 %v285
    %v438 = vunpack.c.l.b16 %v286
    %v439 = vunpack.c.h.b16 %v286
    %v440 = vunpack.c.l.b16 %v287
    %v441 = vunpack.c.h.b16 %v287
    %v442 = vunpack.c.l.b16 %v288
    %v443 = vunpack.c.h.b16 %v288
    %v444 = vunpack.c.l.b16 %v289
    %v445 = vunpack.c.h.b16 %v289
    %v446 = vunpack.c.l.b16 %v290
    %v447 = vunpack.c.h.b16 %v290
    %v448 = vunpack.c.l.b16 %v291
    %v449 = vunpack.c.h.b16 %v291
    %v450 = vunpack.c.l.b16 %v292
    %v451 = vunpack.c.h.b16 %v292
    %v452 = vunpack.c.l.b16 %v293
    %v453 = vunpack.c.h.b16 %v293
    %v454 = vunpack.c.l.b16 %v294
    %v455 = vunpack.c.h.b16 %v294
    %v456 = vunpack.c.l.b16 %v295
    %v457 = vunpack.c.h.b16 %v295
    %v458 = vunpack.c.l.b16 %v296
    %v459 = vunpack.c.h.b16 %v296
    %v460 = vunpack.c.l.b16 %v297
    %v461 = vunpack.c.h.b16 %v297
    %v462 = vunpack.c.l.b16 %v298
    %v463 = vunpack.c.h.b16 %v298
    %v464 = vunpack.c.l.b16 %v299
    %v465 = vunpack.c.h.b16 %v299
    %v466 = vunpack.c.l.b16 %v300
    %v467 = vunpack.c.h.b16 %v300
    %v468 = vunpack.c.l.b16 %v301
    %v469 = vunpack.c.h.b16 %v301
    %v470 = vunpack.c.l.b16 %v302
    %v471 = vunpack.c.h.b16 %v302
    %v472 = vunpack.c.l.b16 %v303
    %v473 = vunpack.c.h.b16 %v303
    %v474 = vunpack.c.l.b16 %v304
    %v475 = vunpack.c.h.b16 %v304
    %v476 = vunpack.c.l.b16 %v305
    %v477 = vunpack.c.h.b16 %v305
    %v478 = vunpack.c.l.b16 %v306
    %v479 = vunpack.c.h.b16 %v306
    %v480 = vunpack.c.l.b16 %v307
    %v481 = vunpack.c.h.b16 %v307
    %v482 = vunpack.c.l.b16 %v308
    %v483 = vunpack.c.h.b16 %v308
    %v484 = vunpack.c.l.b16 %v309
    %v485 = vunpack.c.h.b16 %v309
    %v486 = vunpack.c.l.b16 %v310
    %v487 = vunpack.c.h.b16 %v310
    %v488 = vunpack.c.l.b16 %v311
    %v489 = vunpack.c.h.b16 %v311
    %v490 = vunpack.c.l.b16 %v312
    %v491 = vunpack.c.h.b16 %v312
    %v492 = vunpack.c.l.b16 %v313
    %v493 = vunpack.c.h.b16 %v313
    %v494 = vunpack.c.l.b16 %v314
    %v495 = vunpack.c.h.b16 %v314
    %v496 = vunpack.c.l.b16 %v315
    %v497 = vunpack.c.h.b16 %v315
    %v498 = vunpack.c.l.b16 %v316
    %v499 = vunpack.c.h.b16 %v316
    %v500 = vunpack.c.l.b16 %v317
    %v501 = vunpack.c.h.b16 %v317
    %v502 = vunpack.c.l.b16 %v318
    %v503 = vunpack.c.h.b16 %v318
    %v504 = vunpack.c.l.b16 %v319
    %v505 = vunpack.c.h.b16 %v319
    %v506 = vunpack.c.l.b16 %v320
    %v507 = vunpack.c.h.b16 %v320
    %v508 = vunpack.c.l.b16 %v321
    %v509 = vunpack.c.h.b16 %v321
    %v510 = vunpack.c.l.b16 %v322
    %v511 = vunpack.c.h.b16 %v322
    %v512 = vunpack.c.l.b16 %v323
    %v513 = vunpack.c.h.b16 %v323
    %v514 = vunpack.c.l.b16 %v324
    %v515 = vunpack.c.h.b16 %v324
    %v516 = vunpack.c.l.b16 %v325
    %v517 = vunpack.c.h.b16 %v325
    %v518 = vunpack.c.l.b16 %v326
    %v519 = vunpack.c.h.b16 %v326
    %v520 = vunpack.c.l.b16 %v327
    %v521 = vunpack.c.h.b16 %v327
    %v522 = vunpack.c.l.b16 %v328
    %v523 = vunpack.c.h.b16 %v328
    %v524 = vunpack.c.l.b16 %v329
    %v525 = vunpack.c.h.b16 %v329
    %v526 = vunpack.c.l.b16 %v330
    %v527 = vunpack.c.h.b16 %v330
    %v528 = vunpack.c.l.b16 %v331
    %v529 = vunpack.c.h.b16 %v331
    %v530 = vunpack.c.l.b16 %v332
    %v531 = vunpack.c.h.b16 %v332
    %v532 = vunpack.c.l.b16 %v333
    %v533 = vunpack.c.h.b16 %v333
    %v534 = vunpack.c.l.b16 %v334
    %v535 = vunpack.c.h.b16 %v334
    %v536 = vunpack.c.l.b16 %v335
    %v537 = vunpack.c.h.b16 %v335
    %v538 = vunpack.c.l.b16 %v336
    %v539 = vunpack.c.h.b16 %v336
    %v540 = vunpack.c.l.b16 %v337
    %v541 = vunpack.c.h.b16 %v337
    %v542 = vpack.c.b16 %v416, %v414
    %v543 = vpack.c.b16 %v417, %v415
    %v544 = vpack.c.b16 %v420, %v418
    %v545 = vpack.c.b16 %v421, %v419
    %v546 = vpack.c.b16 %v424, %v422
    %v547 = vpack.c.b16 %v425, %v423
    %v548 = vpack.c.b16 %v428, %v426
    %v549 = vpack.c.b16 %v429, %v427
    %v550 = vpack.c.b16 %v432, %v430
    %v551 = vpack.c.b16 %v433, %v431
    %v552 = vpack.c.b16 %v436, %v434
    %v553 = vpack.c.b16 %v437, %v435
    %v554 = vpack.c.b16 %v440, %v438
    %v555 = vpack.c.b16 %v441, %v439
    %v556 = vpack.c.b16 %v444, %v442
    %v557 = vpack.c.b16 %v445, %v443
    %v558 = vpack.c.b16 %v448, %v446
    %v559 = vpack.c.b16 %v449, %v447
    %v560 = vpack.c.b16 %v452, %v450
    %v561 = vpack.c.b16 %v453, %v451
    %v562 = vpack.c.b16 %v456, %v454
    %v563 = vpack.c.b16 %v457, %v455
    %v564 = vpack.c.b16 %v460, %v458
    %v565 = vpack.c.b16 %v461, %v459
    %v566 = vpack.c.b16 %v464, %v462
    %v567 = vpack.c.b16 %v465, %v463
    %v568 = vpack.c.b16 %v468, %v466
    %v569 = vpack.c.b16 %v469, %v467
    %v570 = vpack.c.b16 %v472, %v470
    %v571 = vpack.c.b16 %v473, %v471
    %v572 = vpack.c.b16 %v476, %v474
    %v573 = vpack.c.b16 %v477, %v475
    %v574 = vpack.c.b16 %v480, %v478
    %v575 = vpack.c.b16 %v481, %v479
    %v576 = vpack.c.b16 %v484, %v482
    %v577 = vpack.c.b16 %v485, %v483
    %v578 = vpack.c.b16 %v488, %v486
    %v579 = vpack.c.b16 %v489, %v487
    %v580 = vpack.c.b16 %v492, %v490
    %v581 = vpack.c.b16 %v493, %v491
    %v582 = vpack.c.b16 %v496, %v494
    %v583 = vpack.c.b16 %v497, %v495
    %v584 = vpack.c.b16 %v500, %v498
    %v585 = vpack.c.b16 %v501, %v499
    %v586 = vpack.c.b16 %v504, %v502
    %v587 = vpack.c.b16 %v505, %v503
    %v588 = vpack.c.b16 %v508, %v506
    %v589 = vpack.c.b16 %v509, %v507
    %v590 = vpack.c.b16 %v512, %v510
    %v591 = vpack.c.b16 %v513, %v511
    %v592 = vpack.c.b16 %v516, %v514
    %v593 = vpack.c.b16 %v517, %v515
    %v594 = vpack.c.b16 %v520, %v518
    %v595 = vpack.c.b16 %v521, %v519
    %v596 = vpack.c.b16 %v524, %v522
    %v597 = vpack.c.b16 %v525, %v523
    %v598 = vpack.c.b16 %v528, %v526
    %v599 = vpack.c.b16 %v529, %v527
    %v600 = vpack.c.b16 %v532, %v530
    %v601 = vpack.c.b16 %v533, %v531
    %v602 = vpack.c.b16 %v536, %v534
    %v603 = vpack.c.b16 %v537, %v535
    %v604 = vpack.c.b16 %v540, %v538
    %v605 = vpack.c.b16 %v541, %v539
    %670 = vmatprep.subr.bf16.mxu0 %v543
    %671 = vmatpush1.bf16.msra.mxu0 %v542
    %672 = vmatprep.subr.bf16.mxu0 %v545
    %673 = vmatpush1.bf16.msra.mxu0 %v544
    %674 = vmatprep.subr.bf16.mxu0 %v547
    %675 = vmatpush1.bf16.msra.mxu0 %v546
    %676 = vmatprep.subr.bf16.mxu0 %v549
    %677 = vmatpush1.bf16.msra.mxu0 %v548
    %678 = vmatprep.subr.bf16.mxu0 %v551
    %679 = vmatpush1.bf16.msra.mxu0 %v550
    %680 = vmatprep.subr.bf16.mxu0 %v553
    %681 = vmatpush1.bf16.msra.mxu0 %v552
    %682 = vmatprep.subr.bf16.mxu0 %v555
    %683 = vmatpush1.bf16.msra.mxu0 %v554
    %684 = vmatprep.subr.bf16.mxu0 %v557
    %685 = vmatpush1.bf16.msra.mxu0 %v556
    %686 = vmatprep.subr.bf16.mxu0 %v559
    %687 = vmatpush1.bf16.msra.mxu0 %v558
    %688 = vmatprep.subr.bf16.mxu0 %v561
    %689 = vmatpush1.bf16.msra.mxu0 %v560
    %690 = vmatprep.subr.bf16.mxu0 %v563
    %691 = vmatpush1.bf16.msra.mxu0 %v562
    %692 = vmatprep.subr.bf16.mxu0 %v565
    %693 = vmatpush1.bf16.msra.mxu0 %v564
    %694 = vmatprep.subr.bf16.mxu0 %v567
    %695 = vmatpush1.bf16.msra.mxu0 %v566
    %696 = vmatprep.subr.bf16.mxu0 %v569
    %697 = vmatpush1.bf16.msra.mxu0 %v568
    %698 = vmatprep.subr.bf16.mxu0 %v571
    %699 = vmatpush1.bf16.msra.mxu0 %v570
    %700 = vmatprep.subr.bf16.mxu0 %v573
    %701 = vmatpush1.bf16.msra.mxu0 %v572
    %702 = vmatprep.mubr.bf16.mxu0 %v271
    %703 = vmatmul.mubr.bf16.gmra.mrb[0].mxu0 %v270
    %v704 = vpop.f32.mrb[0].mxu0
    %v705 = vadd.f32 %v343, %v704
    %v706 = vpop.f32.mrb[0].mxu0
    %v707 = vadd.f32 %v347, %v706
    %v708 = vpop.f32.mrb[0].mxu0
    %v709 = vadd.f32 %v343, %v708
    %v710 = vpop.f32.mrb[0].mxu0
    %v711 = vadd.f32 %v347, %v710
    %712 = vdwg.mxu0
    %713 = vmatprep.subr.bf16.mxu0 %v575
    %714 = vmatpush1.bf16.msra.mxu0 %v574
    %715 = vmatprep.subr.bf16.mxu0 %v577
    %716 = vmatpush1.bf16.msra.mxu0 %v576
    %717 = vmatprep.subr.bf16.mxu0 %v579
    %718 = vmatpush1.bf16.msra.mxu0 %v578
    %719 = vmatprep.subr.bf16.mxu0 %v581
    %720 = vmatpush1.bf16.msra.mxu0 %v580
    %721 = vmatprep.subr.bf16.mxu0 %v583
    %722 = vmatpush1.bf16.msra.mxu0 %v582
    %723 = vmatprep.subr.bf16.mxu0 %v585
    %724 = vmatpush1.bf16.msra.mxu0 %v584
    %725 = vmatprep.subr.bf16.mxu0 %v587
    %726 = vmatpush1.bf16.msra.mxu0 %v586
    %727 = vmatprep.subr.bf16.mxu0 %v589
    %728 = vmatpush1.bf16.msra.mxu0 %v588
    %729 = vmatprep.subr.bf16.mxu0 %v591
    %730 = vmatpush1.bf16.msra.mxu0 %v590
    %731 = vmatprep.subr.bf16.mxu0 %v593
    %732 = vmatpush1.bf16.msra.mxu0 %v592
    %733 = vmatprep.subr.bf16.mxu0 %v595
    %734 = vmatpush1.bf16.msra.mxu0 %v594
    %735 = vmatprep.subr.bf16.mxu0 %v597
    %736 = vmatpush1.bf16.msra.mxu0 %v596
    %737 = vmatprep.subr.bf16.mxu0 %v599
    %738 = vmatpush1.bf16.msra.mxu0 %v598
    %739 = vmatprep.subr.bf16.mxu0 %v601
    %740 = vmatpush1.bf16.msra.mxu0 %v600
    %741 = vmatprep.subr.bf16.mxu0 %v603
    %742 = vmatpush1.bf16.msra.mxu0 %v602
    %743 = vmatprep.subr.bf16.mxu0 %v605
    %744 = vmatpush1.bf16.msra.mxu0 %v604
    %745 = vmatprep.mubr.bf16.mxu0 %v273
    %746 = vmatmul.mubr.bf16.gmra.mrb[0].mxu0 %v272
    %v747 = vpop.f32.mrb[0].mxu0
    %v748 = vadd.f32 %v705, %v747
    %v749 = vpop.f32.mrb[0].mxu0
    %v750 = vadd.f32 %v707, %v749
    %v751 = vpop.f32.mrb[0].mxu0
    %v752 = vadd.f32 %v709, %v751
    %v753 = vpop.f32.mrb[0].mxu0
    %v754 = vadd.f32 %v711, %v753
    %755 = vdwg.mxu0
    %vm756 = vcmp.ge.f32.partialorder %v748, 0.0
    %vm757 = vcmp.ge.f32.partialorder %v750, 0.0
    %vm758 = vcmp.ge.f32.partialorder %v752, 0.0
    %vm759 = vcmp.ge.f32.partialorder %v754, 0.0
    %v760 = vmul.f32 %v748, 0.2
    %v761 = vmul.f32 %v750, 0.2
    %v762 = vmul.f32 %v752, 0.2
    %v763 = vmul.f32 %v754, 0.2
    %v764 = vsel %vm756, %v748, %v760
    %v765 = vsel %vm757, %v750, %v761
    %v766 = vsel %vm758, %v752, %v762
    %v767 = vsel %vm759, %v754, %v763
    %v768 = vpack.c.bf16 %v766, %v764
    %v769 = vpack.c.bf16 %v767, %v765
    %v770 = vld [vmem:[#allocation8] sm:$0xf]
    %v771 = vld [vmem:[#allocation8 + $0x4] sm:$0xf]
    %v772 = vld [vmem:[#allocation8 + $0x8] sm:$0xf]
    %v773 = vld [vmem:[#allocation8 + $0xc] sm:$0xf]
    %v774 = vld [vmem:[#allocation8 + $0x10] sm:$0xf]
    %v775 = vld [vmem:[#allocation8 + $0x14] sm:$0xf]
    %v776 = vld [vmem:[#allocation8 + $0x18] sm:$0xf]
    %v777 = vld [vmem:[#allocation8 + $0x1c] sm:$0xf]
    %v778 = vld [vmem:[#allocation8 + $0x20] sm:$0xf]
    %v779 = vld [vmem:[#allocation8 + $0x24] sm:$0xf]
    %v780 = vld [vmem:[#allocation8 + $0x28] sm:$0xf]
    %v781 = vld [vmem:[#allocation8 + $0x2c] sm:$0xf]
    %v782 = vld [vmem:[#allocation8 + $0x30] sm:$0xf]
    %v783 = vld [vmem:[#allocation8 + $0x34] sm:$0xf]
    %v784 = vld [vmem:[#allocation8 + $0x38] sm:$0xf]
    %v785 = vld [vmem:[#allocation8 + $0x3c] sm:$0xf]
    %v786 = vld [vmem:[#allocation8 + $0x40] sm:$0xf]
    %v787 = vld [vmem:[#allocation8 + $0x44] sm:$0xf]
    %v788 = vld [vmem:[#allocation8 + $0x48] sm:$0xf]
    %v789 = vld [vmem:[#allocation8 + $0x4c] sm:$0xf]
    %v790 = vld [vmem:[#allocation8 + $0x50] sm:$0xf]
    %v791 = vld [vmem:[#allocation8 + $0x54] sm:$0xf]
    %v792 = vld [vmem:[#allocation8 + $0x58] sm:$0xf]
    %v793 = vld [vmem:[#allocation8 + $0x5c] sm:$0xf]
    %v794 = vld [vmem:[#allocation8 + $0x60] sm:$0xf]
    %v795 = vld [vmem:[#allocation8 + $0x64] sm:$0xf]
    %v796 = vld [vmem:[#allocation8 + $0x68] sm:$0xf]
    %v797 = vld [vmem:[#allocation8 + $0x6c] sm:$0xf]
    %v798 = vld [vmem:[#allocation8 + $0x70] sm:$0xf]
    %v799 = vld [vmem:[#allocation8 + $0x74] sm:$0xf]
    %v800 = vld [vmem:[#allocation8 + $0x78] sm:$0xf]
    %v801 = vld [vmem:[#allocation8 + $0x7c] sm:$0xf]
    %v802 = vld [vmem:[%s6] sm:$0x1]
    %v804 = vlaneseq
    %v805 = vshrl.u32 %v804, 7
    %v806 = vsub.s32 0, %v805
    %v807 = vrot.slane %v802, %v806
    %v841 = vunpack.c.l.b16 %v770
    %v842 = vunpack.c.l.b16 %v771
    %v843 = vunpack.c.l.b16 %v772
    %v844 = vunpack.c.l.b16 %v773
    %v845 = vunpack.c.l.b16 %v774
    %v846 = vunpack.c.l.b16 %v775
    %v847 = vunpack.c.l.b16 %v776
    %v848 = vunpack.c.l.b16 %v777
    %v849 = vunpack.c.l.b16 %v778
    %v850 = vunpack.c.l.b16 %v779
    %v851 = vunpack.c.l.b16 %v780
    %v852 = vunpack.c.l.b16 %v781
    %v853 = vunpack.c.l.b16 %v782
    %v854 = vunpack.c.l.b16 %v783
    %v855 = vunpack.c.l.b16 %v784
    %v856 = vunpack.c.l.b16 %v785
    %v857 = vunpack.c.l.b16 %v786
    %v858 = vunpack.c.l.b16 %v787
    %v859 = vunpack.c.l.b16 %v788
    %v860 = vunpack.c.l.b16 %v789
    %v861 = vunpack.c.l.b16 %v790
    %v862 = vunpack.c.l.b16 %v791
    %v863 = vunpack.c.l.b16 %v792
    %v864 = vunpack.c.l.b16 %v793
    %v865 = vunpack.c.l.b16 %v794
    %v866 = vunpack.c.l.b16 %v795
    %v867 = vunpack.c.l.b16 %v796
    %v868 = vunpack.c.l.b16 %v797
    %v869 = vunpack.c.l.b16 %v798
    %v870 = vunpack.c.l.b16 %v799
    %v871 = vunpack.c.l.b16 %v800
    %v872 = vunpack.c.l.b16 %v801
    %v873 = vpack.c.b16 %v842, %v841
    %v874 = vpack.c.b16 %v844, %v843
    %v875 = vpack.c.b16 %v846, %v845
    %v876 = vpack.c.b16 %v848, %v847
    %v877 = vpack.c.b16 %v850, %v849
    %v878 = vpack.c.b16 %v852, %v851
    %v879 = vpack.c.b16 %v854, %v853
    %v880 = vpack.c.b16 %v856, %v855
    %v881 = vpack.c.b16 %v858, %v857
    %v882 = vpack.c.b16 %v860, %v859
    %v883 = vpack.c.b16 %v862, %v861
    %v884 = vpack.c.b16 %v864, %v863
    %v885 = vpack.c.b16 %v866, %v865
    %v886 = vpack.c.b16 %v868, %v867
    %v887 = vpack.c.b16 %v870, %v869
    %v888 = vpack.c.b16 %v872, %v871
    %905 = vmatprep.subr.bf16.mxu0 0
    %906 = vmatpush1.bf16.msra.mxu0 %v873
    %907 = vmatprep.subr.bf16.mxu0 0
    %908 = vmatpush1.bf16.msra.mxu0 %v874
    %909 = vmatprep.subr.bf16.mxu0 0
    %910 = vmatpush1.bf16.msra.mxu0 %v875
    %911 = vmatprep.subr.bf16.mxu0 0
    %912 = vmatpush1.bf16.msra.mxu0 %v876
    %913 = vmatprep.subr.bf16.mxu0 0
    %914 = vmatpush1.bf16.msra.mxu0 %v877
    %915 = vmatprep.subr.bf16.mxu0 0
    %916 = vmatpush1.bf16.msra.mxu0 %v878
    %917 = vmatprep.subr.bf16.mxu0 0
    %918 = vmatpush1.bf16.msra.mxu0 %v879
    %919 = vmatprep.subr.bf16.mxu0 0
    %920 = vmatpush1.bf16.msra.mxu0 %v880
    %921 = vmatprep.subr.bf16.mxu0 0
    %922 = vmatpush1.bf16.msra.mxu0 %v881
    %923 = vmatprep.subr.bf16.mxu0 0
    %924 = vmatpush1.bf16.msra.mxu0 %v882
    %925 = vmatprep.subr.bf16.mxu0 0
    %926 = vmatpush1.bf16.msra.mxu0 %v883
    %927 = vmatprep.subr.bf16.mxu0 0
    %928 = vmatpush1.bf16.msra.mxu0 %v884
    %929 = vmatprep.subr.bf16.mxu0 0
    %930 = vmatpush1.bf16.msra.mxu0 %v885
    %931 = vmatprep.subr.bf16.mxu0 0
    %932 = vmatpush1.bf16.msra.mxu0 %v886
    %933 = vmatprep.subr.bf16.mxu0 0
    %934 = vmatpush1.bf16.msra.mxu0 %v887
    %935 = vmatprep.subr.bf16.mxu0 0
    %936 = vmatpush1.bf16.msra.mxu0 %v888
    %937 = vmatprep.mubr.bf16.mxu0 %v769
    %938 = vmatmul.mubr.bf16.gmra.mrb[0].mxu0 %v768
    %v939 = vpop.f32.mrb[0].mxu0
    %v940 = vadd.f32 %v807, %v939
    %v941 = vpop.f32.mrb[0].mxu0
    %v942 = vpop.f32.mrb[0].mxu0
    %v943 = vadd.f32 %v807, %v942
    %v944 = vpop.f32.mrb[0].mxu0
    %945 = vdwg.mxu0
    %v946 = vlaneseq
    %v947 = vand.u32 %v946, 127
    %vm948 = vcmp.lt.s32.totalorder %v947, 4
    %v949 = vsel %vm948, %v940, -1e+30
    %v950 = vsel %vm948, %v943, -1e+30
    %951 = vmax.xlane.f32.xlu0 %v949
    %v952 = vpop.xlane.xlu0 %951
    %953 = vmax.xlane.f32.xlu0 %v950
    %v954 = vpop.xlane.xlu0 %953
    %v955 = vsub.f32 %v949, %v952
    %v956 = vsub.f32 %v950, %v954
    %v957 = vmul.f32 %v955, 1.442695
    %v958 = vpow.pop %v957
    %v959 = vmul.f32 %v956, 1.442695
    %v960 = vpow.pop %v959
    %961 = vadd.xlane.f32.xlu0 %v958
    %v962 = vpop.xlane.xlu0 %961
    %963 = vadd.xlane.f32.xlu0 %v960
    %v964 = vpop.xlane.xlu0 %963
    %v965 = vlog2.pop %v962
    %v966 = vmul.f32 %v965, 0.6931472
    %v967 = vlog2.pop %v964
    %v968 = vmul.f32 %v967, 0.6931472
    %v969 = vsub.f32 %v955, %v966
    %v970 = vsub.f32 %v956, %v968
    %971 = vst [vmem:[#allocation10] sm:$0xff] %v969
    %972 = vst [vmem:[#allocation10 + $0x8] sm:$0xff] %v970
    // Predicated region
    $region46: #{tpu_custom_call.1} parent=1 // pred_check
      _
    $region47: #{tpu_custom_call.1} parent=1 // pred_check_branch
      %974 = sbr.rel (0) target = $region49
    $region48: #{tpu_custom_call.1} parent=1 // pred_region
      %s976 = ssub.s32 256, 256
      %977 = vsyncadd [#allocation4], %s976
      %s978 = sshll.u32 [#allocation10], 4
      %s979 = int_to_ptr.vmem [resolvable:$true] %s978
      %984 = dma.vmem_to_hbm [thread:$0]  %s979, 256, %s7, [#allocation4], 128, 128, 8
    $region49: #{tpu_custom_call.1} parent=1 // pred_fallthru
      _
    // Predicated region
    $region50: #{tpu_custom_call.1} parent=1 // pred_check
      _
    $region51: #{tpu_custom_call.1} parent=1 // pred_check_branch
      %986 = sbr.rel (0) target = $region53
    $region52: #{tpu_custom_call.1} parent=1 // pred_region
      %987 = dma.done [#allocation4], 256
    $region53: #{tpu_custom_call.1} parent=1 // pred_fallthru
      _
    %988 = vsyncpa [#allocation3], 1
    %989 = vsyncpa [#allocation6], 1
    %990 = vsyncpa [#allocation9], 1
    %991 = vsyncpa [#allocation4], 1

</llo_original>
